<compile_context>
chip_gen: v7x
topology: tpu7x:2x2x1
jax: 0.10.0
libtpu: 0.0.40
codegen_flags: <defaults>
</compile_context>

<pallas_src>
import functools
import math

import jax
import jax.numpy as jnp
from jax import lax
from jax.experimental import pallas as pl
from jax.experimental.pallas import tpu as pltpu


# --------------------------------------------------------------------------- #
# Helpers
# --------------------------------------------------------------------------- #
def _choose_tile(n, preferred):
    """Largest divisor of n that is <= preferred and sublane-aligned, else n."""
    if n <= preferred:
        return n
    for t in range(preferred, 0, -1):
        if n % t == 0 and t % 8 == 0:
            return t
    return n  # fall back to the full extent (always a legal block shape)


def _const_spec(shape):
    """BlockSpec for a grid-invariant operand; single-buffer it when supported."""
    ndim = len(shape)
    index_map = lambda *_: (0,) * ndim
    try:
        return pl.BlockSpec(shape, index_map, pipeline_mode=pl.Buffered(1))
    except (TypeError, AttributeError):
        return pl.BlockSpec(shape, index_map)


# --------------------------------------------------------------------------- #
# Kernel 1: fused Q/K/V projections for all heads
# --------------------------------------------------------------------------- #
def qkv_proj_kernel(q_ref, k_ref, v_ref,
                    wq_ref, wk_ref, wv_ref,
                    bq_ref, bk_ref, bv_ref,
                    qp_ref, kp_ref, vp_ref,
                    *, n_head, d_head, compute_dtype):
    """One grid step == one (batch, L-tile)."""
    f32 = jnp.float32

    def proj(x_ref, w_ref, b_ref, o_ref):
        # Cast to the MXU dtype inside the kernel; accumulate f32; add f32 bias.
        x = x_ref[0].astype(compute_dtype)                                # (tl, D)
        y = jnp.dot(x, w_ref[...], preferred_element_type=f32) + b_ref[...]
        y = y.astype(compute_dtype)                                       # (tl, D)
        for h in range(n_head):                                           # static
            # Head-major column split (matches nn view(B, L, H, dh)).
            o_ref[0, h] = y[:, h * d_head:(h + 1) * d_head]               # (tl, dh)

    proj(q_ref, wq_ref, bq_ref, qp_ref)   # 1/sqrt(dh) already folded into wq/bq
    proj(k_ref, wk_ref, bk_ref, kp_ref)
    proj(v_ref, wv_ref, bv_ref, vp_ref)


# --------------------------------------------------------------------------- #
# Kernel 2: flash attention + fused concat/output-projection
# --------------------------------------------------------------------------- #
def flash_attn_kernel(qp_ref, kp_ref, vp_ref, wc_ref, bc_ref, out_ref,
                      m_sc, l_sc, acc_sc, out_sc, *, compute_dtype):
    """Grid: (batch, q_tile, head, kv_tile); head/kv are reduction ('arbitrary')."""
    f32 = jnp.float32
    h = pl.program_id(2)
    kv = pl.program_id(3)
    n_head = pl.num_programs(2)
    n_kv = pl.num_programs(3)

    @pl.when((h == 0) & (kv == 0))
    def _():
        out_sc[...] = jnp.zeros(out_sc.shape, f32)

    @pl.when(kv == 0)
    def _():
        m_sc[...] = jnp.full(m_sc.shape, -jnp.inf, f32)
        l_sc[...] = jnp.zeros(l_sc.shape, f32)
        acc_sc[...] = jnp.zeros(acc_sc.shape, f32)

    q = qp_ref[0, 0]      # (tq, dh) compute dtype, pre-scaled by 1/sqrt(dh)
    k = kp_ref[0, 0]      # (tk, dh)
    v = vp_ref[0, 0]      # (tk, dh)

    # QK^T contracting the last dims of both operands (MXU-native transposed B).
    s = lax.dot_general(q, k, (((1,), (1,)), ((), ())),
                        preferred_element_type=f32)                        # (tq, tk)

    # Online (flash) softmax update; all softmax math in f32 (v5e-safe).
    m_prev = m_sc[...]                                                     # (tq, 1)
    m_new = jnp.maximum(m_prev, jnp.max(s, axis=-1, keepdims=True))
    alpha = jnp.exp(m_prev - m_new)
    p = jnp.exp(s - m_new)                                                 # (tq, tk)

    l_sc[...] = alpha * l_sc[...] + jnp.sum(p, axis=-1, keepdims=True)
    # Deferred normalization: unnormalized PV accumulate; exp(s) cast straight
    # to the MXU dtype (no (tq, tk) normalization multiply).
    acc_sc[...] = alpha * acc_sc[...] + jnp.dot(
        p.astype(compute_dtype), v, preferred_element_type=f32)            # (tq, dh)
    m_sc[...] = m_new

    @pl.when(kv == n_kv - 1)
    def _():
        # Normalize once per head on the (tq, dh) accumulator, then fuse
        # "concat + w_concat": out_acc += o_h @ Wc[h].  Output stays lane-dense.
        oh = acc_sc[...] * pl.reciprocal(l_sc[...], approx=True)
        out_sc[...] = out_sc[...] + jnp.dot(
            oh.astype(compute_dtype), wc_ref[0], preferred_element_type=f32)

    @pl.when((h == n_head - 1) & (kv == n_kv - 1))
    def _():
        out_ref[0] = (out_sc[...] + bc_ref[...]).astype(out_ref.dtype)


# --------------------------------------------------------------------------- #
# One-time weight preparation (do at init, not per call)
# --------------------------------------------------------------------------- #
def prepare_params(params, d_model, n_head, compute_dtype=jnp.bfloat16):
    """Transpose nn.Linear weights to (in, out), fold 1/sqrt(dh) into wq/bq,
    split the output projection head-major, cast weights to the MXU dtype."""
    if d_model % n_head != 0:
        raise ValueError(f"d_model={d_model} not divisible by n_head={n_head}")
    dh = d_model // n_head
    scale = 1.0 / math.sqrt(dh)
    return {
        "wqT": (params["wq"].T * scale).astype(compute_dtype),   # (D, D)
        "wkT": params["wk"].T.astype(compute_dtype),             # (D, D)
        "wvT": params["wv"].T.astype(compute_dtype),             # (D, D)
        # out = concat_h(o_h) @ Wc.T  ==  sum_h o_h @ Wc.T[h*dh:(h+1)*dh, :]
        "wc3": params["wc"].T.reshape(n_head, dh, d_model).astype(compute_dtype),
        "bq": (params["bq"] * scale).reshape(1, d_model).astype(jnp.float32),
        "bk": params["bk"].reshape(1, d_model).astype(jnp.float32),
        "bv": params["bv"].reshape(1, d_model).astype(jnp.float32),
        "bc": params["bc"].reshape(1, d_model).astype(jnp.float32),
    }


# --------------------------------------------------------------------------- #
# Wrapper
# --------------------------------------------------------------------------- #
def multi_head_attention(q, k, v, prep, n_head, *,
                         compute_dtype=jnp.bfloat16,
                         q_tile=256, kv_tile=256, proj_tile=256,
                         vmem_limit_bytes=64 * 1024 * 1024):
    """q, k, v: (B, L, D) in native dtype.  prep: output of prepare_params."""
    B, L, D = q.shape
    if D % n_head != 0:
        raise ValueError(f"d_model={D} not divisible by n_head={n_head}")
    H = n_head
    dh = D // H
    out_dtype = q.dtype

    tl = _choose_tile(L, proj_tile)
    tq = _choose_tile(L, q_tile)
    tk = _choose_tile(L, kv_tile)

    # ---------------- Kernel 1: Q/K/V projections (all heads at once) -------- #
    x_spec = pl.BlockSpec((1, tl, D), lambda b, li: (b, li, 0))
    w_spec = _const_spec((D, D))
    bias_spec = _const_spec((1, D))
    p_spec = pl.BlockSpec((1, H, tl, dh), lambda b, li: (b, 0, li, 0))
    proj_shape = jax.ShapeDtypeStruct((B, H, L, dh), compute_dtype)

    qp, kp, vp = pl.pallas_call(
        functools.partial(qkv_proj_kernel, n_head=H, d_head=dh,
                          compute_dtype=compute_dtype),
        out_shape=(proj_shape, proj_shape, proj_shape),
        grid_spec=pltpu.PrefetchScalarGridSpec(
            num_scalar_prefetch=0,
            grid=(B, L // tl),
            in_specs=[x_spec, x_spec, x_spec,
                      w_spec, w_spec, w_spec,
                      bias_spec, bias_spec, bias_spec],
            out_specs=(p_spec, p_spec, p_spec)),
        compiler_params=pltpu.CompilerParams(
            dimension_semantics=("parallel", "parallel"),
            vmem_limit_bytes=vmem_limit_bytes),
    )(q, k, v,
      prep["wqT"], prep["wkT"], prep["wvT"],
      prep["bq"], prep["bk"], prep["bv"])

    # ------- Kernel 2: flash attention + fused concat/output projection ------ #
    q_spec = pl.BlockSpec((1, 1, tq, dh), lambda b, qi, h, kv: (b, h, qi, 0))
    kv_spec = pl.BlockSpec((1, 1, tk, dh), lambda b, qi, h, kv: (b, h, kv, 0))
    wc_spec = pl.BlockSpec((1, dh, D), lambda b, qi, h, kv: (h, 0, 0))
    bc_spec = _const_spec((1, D))
    out_spec = pl.BlockSpec((1, tq, D), lambda b, qi, h, kv: (b, qi, 0))

    return pl.pallas_call(
        functools.partial(flash_attn_kernel, compute_dtype=compute_dtype),
        out_shape=jax.ShapeDtypeStruct((B, L, D), out_dtype),
        grid_spec=pltpu.PrefetchScalarGridSpec(
            num_scalar_prefetch=0,
            grid=(B, L // tq, H, L // tk),
            in_specs=[q_spec, kv_spec, kv_spec, wc_spec, bc_spec],
            out_specs=out_spec,
            scratch_shapes=[pltpu.VMEM((tq, 1), jnp.float32),   # running max
                            pltpu.VMEM((tq, 1), jnp.float32),   # running sum
                            pltpu.VMEM((tq, dh), jnp.float32),  # PV accumulator
                            pltpu.VMEM((tq, D), jnp.float32)]), # output-proj acc
        compiler_params=pltpu.CompilerParams(
            dimension_semantics=("parallel", "parallel", "arbitrary", "arbitrary"),
            vmem_limit_bytes=vmem_limit_bytes),
    )(qp, kp, vp, prep["wc3"], prep["bc"])


# --------------------------------------------------------------------------- #
# Pure-JAX reference & init (validation only)
# --------------------------------------------------------------------------- #
def reference(q, k, v, params, n_head):
    """Pure-JAX f32 replica of the PyTorch forward."""
    def linear(x, w, b):
        return x @ w.T + b

    B, L, D = q.shape
    dt = D // n_head

    def split(t):
        return t.reshape(B, L, n_head, dt).transpose(0, 2, 1, 3)

    Q = split(linear(q, params["wq"], params["bq"]))
    K = split(linear(k, params["wk"], params["bk"]))
    V = split(linear(v, params["wv"], params["bv"]))

    score = jnp.einsum("bhld,bhmd->bhlm", Q, K) / math.sqrt(dt)
    score = jax.nn.softmax(score, axis=-1)
    out = jnp.einsum("bhlm,bhmd->bhld", score, V)
    out = out.transpose(0, 2, 1, 3).reshape(B, L, D)
    return linear(out, params["wc"], params["bc"])


def init_params(key, d_model):
    keys = jax.random.split(key, 8)
    bound = 1.0 / math.sqrt(d_model)

    def u(k, shape):
        return jax.random.uniform(k, shape, jnp.float32, -bound, bound)

    return {
        "wq": u(keys[0], (d_model, d_model)), "bq": u(keys[1], (d_model,)),
        "wk": u(keys[2], (d_model, d_model)), "bk": u(keys[3], (d_model,)),
        "wv": u(keys[4], (d_model, d_model)), "bv": u(keys[5], (d_model,)),
        "wc": u(keys[6], (d_model, d_model)), "bc": u(keys[7], (d_model,)),
    }


if __name__ == "__main__":
    root = jax.random.PRNGKey(0)

    # Case 1: single-tile path (blocks == full extents).
    B, L, D, H = 2, 8, 32, 4
    kq, kk, kv_, kp = jax.random.split(root, 4)
    q = jax.random.normal(kq, (B, L, D), jnp.float32)
    k = jax.random.normal(kk, (B, L, D), jnp.float32)
    v = jax.random.normal(kv_, (B, L, D), jnp.float32)
    params = init_params(kp, D)
    prep = prepare_params(params, D, H)

    out = jax.block_until_ready(multi_head_attention(q, k, v, prep, H))
    ref = jax.block_until_ready(reference(q, k, v, params, H))
    assert out.shape == (B, L, D)
    err1 = jnp.max(jnp.abs(out - ref))
    assert jnp.allclose(out, ref, atol=3e-2, rtol=3e-2), f"max abs err {err1}"

    # Case 2: multi-tile path — exercises the online-softmax KV loop, the head
    # grid axis accumulator, and the q-tile axis (tq = tk = tl = 8, L = 16).
    B2, L2, D2, H2 = 2, 16, 32, 4
    kq2, kk2, kv2, kp2 = jax.random.split(jax.random.PRNGKey(1), 4)
    q2 = jax.random.normal(kq2, (B2, L2, D2), jnp.float32)
    k2 = jax.random.normal(kk2, (B2, L2, D2), jnp.float32)
    v2 = jax.random.normal(kv2, (B2, L2, D2), jnp.float32)
    params2 = init_params(kp2, D2)
    prep2 = prepare_params(params2, D2, H2)

    out2 = jax.block_until_ready(
        multi_head_attention(q2, k2, v2, prep2, H2,
                             q_tile=8, kv_tile=8, proj_tile=8))
    ref2 = jax.block_until_ready(reference(q2, k2, v2, params2, H2))
    assert out2.shape == (B2, L2, D2)
    err2 = jnp.max(jnp.abs(out2 - ref2))
    assert jnp.allclose(out2, ref2, atol=3e-2, rtol=3e-2), f"max abs err {err2}"

    print("KERNEL_OK")
</pallas_src>

<mosaic_0001>
module attributes {stable_mosaic.version = 11 : i64} {
  func.func @qkv_proj_kernel(%arg0: i32, %arg1: i32, %arg2: memref<1x8x32xf32, #tpu.memory_space<vmem>>, %arg3: memref<1x8x32xf32, #tpu.memory_space<vmem>>, %arg4: memref<1x8x32xf32, #tpu.memory_space<vmem>>, %arg5: memref<32x32xbf16, #tpu.memory_space<vmem>>, %arg6: memref<32x32xbf16, #tpu.memory_space<vmem>>, %arg7: memref<32x32xbf16, #tpu.memory_space<vmem>>, %arg8: memref<1x32xf32, #tpu.memory_space<vmem>>, %arg9: memref<1x32xf32, #tpu.memory_space<vmem>>, %arg10: memref<1x32xf32, #tpu.memory_space<vmem>>, %arg11: memref<1x4x8x8xbf16, #tpu.memory_space<vmem>>, %arg12: memref<1x4x8x8xbf16, #tpu.memory_space<vmem>>, %arg13: memref<1x4x8x8xbf16, #tpu.memory_space<vmem>>) attributes {dimension_semantics = [#tpu.dimension_semantics<parallel>, #tpu.dimension_semantics<parallel>], iteration_bounds = array<i64: 2, 1>, scalar_prefetch = 0 : i64, scratch_operands = 0 : i64, tpu.core_type = #tpu.core_type<tc>, window_params = [{transform_indices = @transform_0, window_bounds = array<i64: 1, 8, 32>}, {transform_indices = @transform_1, window_bounds = array<i64: 1, 8, 32>}, {transform_indices = @transform_2, window_bounds = array<i64: 1, 8, 32>}, {pipeline_mode = #tpu.pipeline_mode<synchronous>, transform_indices = @transform_3, window_bounds = array<i64: 32, 32>}, {pipeline_mode = #tpu.pipeline_mode<synchronous>, transform_indices = @transform_4, window_bounds = array<i64: 32, 32>}, {pipeline_mode = #tpu.pipeline_mode<synchronous>, transform_indices = @transform_5, window_bounds = array<i64: 32, 32>}, {pipeline_mode = #tpu.pipeline_mode<synchronous>, transform_indices = @transform_6, window_bounds = array<i64: 1, 32>}, {pipeline_mode = #tpu.pipeline_mode<synchronous>, transform_indices = @transform_7, window_bounds = array<i64: 1, 32>}, {pipeline_mode = #tpu.pipeline_mode<synchronous>, transform_indices = @transform_8, window_bounds = array<i64: 1, 32>}, {transform_indices = @transform_9, window_bounds = array<i64: 1, 4, 8, 8>}, {transform_indices = @transform_10, window_bounds = array<i64: 1, 4, 8, 8>}, {transform_indices = @transform_11, window_bounds = array<i64: 1, 4, 8, 8>}]} {
    %c0 = arith.constant 0 : index
    %c0_0 = arith.constant 0 : index
    %c0_1 = arith.constant 0 : index
    %0 = vector.load %arg2[%c0, %c0_0, %c0_1] : memref<1x8x32xf32, #tpu.memory_space<vmem>>, vector<1x8x32xf32>
    %1 = vector.shape_cast %0 : vector<1x8x32xf32> to vector<8x32xf32>
    %2 = arith.truncf %1 : vector<8x32xf32> to vector<8x32xbf16>
    %c0_2 = arith.constant 0 : index
    %c0_3 = arith.constant 0 : index
    %3 = vector.load %arg5[%c0_2, %c0_3] : memref<32x32xbf16, #tpu.memory_space<vmem>>, vector<32x32xbf16>
    %cst = arith.constant dense<0.000000e+00> : vector<8x32xf32>
    %4 = tpu.matmul %2, %3, %cst {dimension_numbers = #tpu.dot_dimension_numbers<[1], [0], [0], [1], [0, 0, 1, 1], [], []>} : vector<8x32xbf16>, vector<32x32xbf16>, vector<8x32xf32> -> vector<8x32xf32>
    %c0_4 = arith.constant 0 : index
    %c0_5 = arith.constant 0 : index
    %5 = vector.load %arg8[%c0_4, %c0_5] : memref<1x32xf32, #tpu.memory_space<vmem>>, vector<1x32xf32>
    %6 = vector.broadcast %5 : vector<1x32xf32> to vector<8x32xf32>
    %7 = arith.addf %4, %6 : vector<8x32xf32>
    %8 = arith.truncf %7 : vector<8x32xf32> to vector<8x32xbf16>
    %9 = vector.extract_strided_slice %8 {offsets = [0, 0], sizes = [8, 8], strides = [1, 1]} : vector<8x32xbf16> to vector<8x8xbf16>
    %c0_6 = arith.constant 0 : index
    %c0_7 = arith.constant 0 : index
    %c0_8 = arith.constant 0 : index
    %c0_9 = arith.constant 0 : index
    %10 = vector.load %arg11[%c0_6, %c0_7, %c0_8, %c0_9] : memref<1x4x8x8xbf16, #tpu.memory_space<vmem>>, vector<1x1x8x8xbf16>
    %11 = vector.shape_cast %10 : vector<1x1x8x8xbf16> to vector<8x8xbf16>
    %12 = vector.shape_cast %9 : vector<8x8xbf16> to vector<1x1x8x8xbf16>
    tpu.vector_store %arg11[%c0_6, %c0_7, %c0_8, %c0_9], %12 {strides = array<i32>} : memref<1x4x8x8xbf16, #tpu.memory_space<vmem>>, vector<1x1x8x8xbf16>,
    %13 = vector.extract_strided_slice %8 {offsets = [0, 8], sizes = [8, 8], strides = [1, 1]} : vector<8x32xbf16> to vector<8x8xbf16>
    %c0_10 = arith.constant 0 : index
    %c1 = arith.constant 1 : index
    %c0_11 = arith.constant 0 : index
    %c0_12 = arith.constant 0 : index
    %14 = vector.load %arg11[%c0_10, %c1, %c0_11, %c0_12] : memref<1x4x8x8xbf16, #tpu.memory_space<vmem>>, vector<1x1x8x8xbf16>
    %15 = vector.shape_cast %14 : vector<1x1x8x8xbf16> to vector<8x8xbf16>
    %16 = vector.shape_cast %13 : vector<8x8xbf16> to vector<1x1x8x8xbf16>
    tpu.vector_store %arg11[%c0_10, %c1, %c0_11, %c0_12], %16 {strides = array<i32>} : memref<1x4x8x8xbf16, #tpu.memory_space<vmem>>, vector<1x1x8x8xbf16>,
    %17 = vector.extract_strided_slice %8 {offsets = [0, 16], sizes = [8, 8], strides = [1, 1]} : vector<8x32xbf16> to vector<8x8xbf16>
    %c0_13 = arith.constant 0 : index
    %c2 = arith.constant 2 : index
    %c0_14 = arith.constant 0 : index
    %c0_15 = arith.constant 0 : index
    %18 = vector.load %arg11[%c0_13, %c2, %c0_14, %c0_15] : memref<1x4x8x8xbf16, #tpu.memory_space<vmem>>, vector<1x1x8x8xbf16>
    %19 = vector.shape_cast %18 : vector<1x1x8x8xbf16> to vector<8x8xbf16>
    %20 = vector.shape_cast %17 : vector<8x8xbf16> to vector<1x1x8x8xbf16>
    tpu.vector_store %arg11[%c0_13, %c2, %c0_14, %c0_15], %20 {strides = array<i32>} : memref<1x4x8x8xbf16, #tpu.memory_space<vmem>>, vector<1x1x8x8xbf16>,
    %21 = vector.extract_strided_slice %8 {offsets = [0, 24], sizes = [8, 8], strides = [1, 1]} : vector<8x32xbf16> to vector<8x8xbf16>
    %c0_16 = arith.constant 0 : index
    %c3 = arith.constant 3 : index
    %c0_17 = arith.constant 0 : index
    %c0_18 = arith.constant 0 : index
    %22 = vector.load %arg11[%c0_16, %c3, %c0_17, %c0_18] : memref<1x4x8x8xbf16, #tpu.memory_space<vmem>>, vector<1x1x8x8xbf16>
    %23 = vector.shape_cast %22 : vector<1x1x8x8xbf16> to vector<8x8xbf16>
    %24 = vector.shape_cast %21 : vector<8x8xbf16> to vector<1x1x8x8xbf16>
    tpu.vector_store %arg11[%c0_16, %c3, %c0_17, %c0_18], %24 {strides = array<i32>} : memref<1x4x8x8xbf16, #tpu.memory_space<vmem>>, vector<1x1x8x8xbf16>,
    %c0_19 = arith.constant 0 : index
    %c0_20 = arith.constant 0 : index
    %c0_21 = arith.constant 0 : index
    %25 = vector.load %arg3[%c0_19, %c0_20, %c0_21] : memref<1x8x32xf32, #tpu.memory_space<vmem>>, vector<1x8x32xf32>
    %26 = vector.shape_cast %25 : vector<1x8x32xf32> to vector<8x32xf32>
    %27 = arith.truncf %26 : vector<8x32xf32> to vector<8x32xbf16>
    %c0_22 = arith.constant 0 : index
    %c0_23 = arith.constant 0 : index
    %28 = vector.load %arg6[%c0_22, %c0_23] : memref<32x32xbf16, #tpu.memory_space<vmem>>, vector<32x32xbf16>
    %cst_24 = arith.constant dense<0.000000e+00> : vector<8x32xf32>
    %29 = tpu.matmul %27, %28, %cst_24 {dimension_numbers = #tpu.dot_dimension_numbers<[1], [0], [0], [1], [0, 0, 1, 1], [], []>} : vector<8x32xbf16>, vector<32x32xbf16>, vector<8x32xf32> -> vector<8x32xf32>
    %c0_25 = arith.constant 0 : index
    %c0_26 = arith.constant 0 : index
    %30 = vector.load %arg9[%c0_25, %c0_26] : memref<1x32xf32, #tpu.memory_space<vmem>>, vector<1x32xf32>
    %31 = vector.broadcast %30 : vector<1x32xf32> to vector<8x32xf32>
    %32 = arith.addf %29, %31 : vector<8x32xf32>
    %33 = arith.truncf %32 : vector<8x32xf32> to vector<8x32xbf16>
    %34 = vector.extract_strided_slice %33 {offsets = [0, 0], sizes = [8, 8], strides = [1, 1]} : vector<8x32xbf16> to vector<8x8xbf16>
    %c0_27 = arith.constant 0 : index
    %c0_28 = arith.constant 0 : index
    %c0_29 = arith.constant 0 : index
    %c0_30 = arith.constant 0 : index
    %35 = vector.load %arg12[%c0_27, %c0_28, %c0_29, %c0_30] : memref<1x4x8x8xbf16, #tpu.memory_space<vmem>>, vector<1x1x8x8xbf16>
    %36 = vector.shape_cast %35 : vector<1x1x8x8xbf16> to vector<8x8xbf16>
    %37 = vector.shape_cast %34 : vector<8x8xbf16> to vector<1x1x8x8xbf16>
    tpu.vector_store %arg12[%c0_27, %c0_28, %c0_29, %c0_30], %37 {strides = array<i32>} : memref<1x4x8x8xbf16, #tpu.memory_space<vmem>>, vector<1x1x8x8xbf16>,
    %38 = vector.extract_strided_slice %33 {offsets = [0, 8], sizes = [8, 8], strides = [1, 1]} : vector<8x32xbf16> to vector<8x8xbf16>
    %c0_31 = arith.constant 0 : index
    %c1_32 = arith.constant 1 : index
    %c0_33 = arith.constant 0 : index
    %c0_34 = arith.constant 0 : index
    %39 = vector.load %arg12[%c0_31, %c1_32, %c0_33, %c0_34] : memref<1x4x8x8xbf16, #tpu.memory_space<vmem>>, vector<1x1x8x8xbf16>
    %40 = vector.shape_cast %39 : vector<1x1x8x8xbf16> to vector<8x8xbf16>
    %41 = vector.shape_cast %38 : vector<8x8xbf16> to vector<1x1x8x8xbf16>
    tpu.vector_store %arg12[%c0_31, %c1_32, %c0_33, %c0_34], %41 {strides = array<i32>} : memref<1x4x8x8xbf16, #tpu.memory_space<vmem>>, vector<1x1x8x8xbf16>,
    %42 = vector.extract_strided_slice %33 {offsets = [0, 16], sizes = [8, 8], strides = [1, 1]} : vector<8x32xbf16> to vector<8x8xbf16>
    %c0_35 = arith.constant 0 : index
    %c2_36 = arith.constant 2 : index
    %c0_37 = arith.constant 0 : index
    %c0_38 = arith.constant 0 : index
    %43 = vector.load %arg12[%c0_35, %c2_36, %c0_37, %c0_38] : memref<1x4x8x8xbf16, #tpu.memory_space<vmem>>, vector<1x1x8x8xbf16>
    %44 = vector.shape_cast %43 : vector<1x1x8x8xbf16> to vector<8x8xbf16>
    %45 = vector.shape_cast %42 : vector<8x8xbf16> to vector<1x1x8x8xbf16>
    tpu.vector_store %arg12[%c0_35, %c2_36, %c0_37, %c0_38], %45 {strides = array<i32>} : memref<1x4x8x8xbf16, #tpu.memory_space<vmem>>, vector<1x1x8x8xbf16>,
    %46 = vector.extract_strided_slice %33 {offsets = [0, 24], sizes = [8, 8], strides = [1, 1]} : vector<8x32xbf16> to vector<8x8xbf16>
    %c0_39 = arith.constant 0 : index
    %c3_40 = arith.constant 3 : index
    %c0_41 = arith.constant 0 : index
    %c0_42 = arith.constant 0 : index
    %47 = vector.load %arg12[%c0_39, %c3_40, %c0_41, %c0_42] : memref<1x4x8x8xbf16, #tpu.memory_space<vmem>>, vector<1x1x8x8xbf16>
    %48 = vector.shape_cast %47 : vector<1x1x8x8xbf16> to vector<8x8xbf16>
    %49 = vector.shape_cast %46 : vector<8x8xbf16> to vector<1x1x8x8xbf16>
    tpu.vector_store %arg12[%c0_39, %c3_40, %c0_41, %c0_42], %49 {strides = array<i32>} : memref<1x4x8x8xbf16, #tpu.memory_space<vmem>>, vector<1x1x8x8xbf16>,
    %c0_43 = arith.constant 0 : index
    %c0_44 = arith.constant 0 : index
    %c0_45 = arith.constant 0 : index
    %50 = vector.load %arg4[%c0_43, %c0_44, %c0_45] : memref<1x8x32xf32, #tpu.memory_space<vmem>>, vector<1x8x32xf32>
    %51 = vector.shape_cast %50 : vector<1x8x32xf32> to vector<8x32xf32>
    %52 = arith.truncf %51 : vector<8x32xf32> to vector<8x32xbf16>
    %c0_46 = arith.constant 0 : index
    %c0_47 = arith.constant 0 : index
    %53 = vector.load %arg7[%c0_46, %c0_47] : memref<32x32xbf16, #tpu.memory_space<vmem>>, vector<32x32xbf16>
    %cst_48 = arith.constant dense<0.000000e+00> : vector<8x32xf32>
    %54 = tpu.matmul %52, %53, %cst_48 {dimension_numbers = #tpu.dot_dimension_numbers<[1], [0], [0], [1], [0, 0, 1, 1], [], []>} : vector<8x32xbf16>, vector<32x32xbf16>, vector<8x32xf32> -> vector<8x32xf32>
    %c0_49 = arith.constant 0 : index
    %c0_50 = arith.constant 0 : index
    %55 = vector.load %arg10[%c0_49, %c0_50] : memref<1x32xf32, #tpu.memory_space<vmem>>, vector<1x32xf32>
    %56 = vector.broadcast %55 : vector<1x32xf32> to vector<8x32xf32>
    %57 = arith.addf %54, %56 : vector<8x32xf32>
    %58 = arith.truncf %57 : vector<8x32xf32> to vector<8x32xbf16>
    %59 = vector.extract_strided_slice %58 {offsets = [0, 0], sizes = [8, 8], strides = [1, 1]} : vector<8x32xbf16> to vector<8x8xbf16>
    %c0_51 = arith.constant 0 : index
    %c0_52 = arith.constant 0 : index
    %c0_53 = arith.constant 0 : index
    %c0_54 = arith.constant 0 : index
    %60 = vector.load %arg13[%c0_51, %c0_52, %c0_53, %c0_54] : memref<1x4x8x8xbf16, #tpu.memory_space<vmem>>, vector<1x1x8x8xbf16>
    %61 = vector.shape_cast %60 : vector<1x1x8x8xbf16> to vector<8x8xbf16>
    %62 = vector.shape_cast %59 : vector<8x8xbf16> to vector<1x1x8x8xbf16>
    tpu.vector_store %arg13[%c0_51, %c0_52, %c0_53, %c0_54], %62 {strides = array<i32>} : memref<1x4x8x8xbf16, #tpu.memory_space<vmem>>, vector<1x1x8x8xbf16>,
    %63 = vector.extract_strided_slice %58 {offsets = [0, 8], sizes = [8, 8], strides = [1, 1]} : vector<8x32xbf16> to vector<8x8xbf16>
    %c0_55 = arith.constant 0 : index
    %c1_56 = arith.constant 1 : index
    %c0_57 = arith.constant 0 : index
    %c0_58 = arith.constant 0 : index
    %64 = vector.load %arg13[%c0_55, %c1_56, %c0_57, %c0_58] : memref<1x4x8x8xbf16, #tpu.memory_space<vmem>>, vector<1x1x8x8xbf16>
    %65 = vector.shape_cast %64 : vector<1x1x8x8xbf16> to vector<8x8xbf16>
    %66 = vector.shape_cast %63 : vector<8x8xbf16> to vector<1x1x8x8xbf16>
    tpu.vector_store %arg13[%c0_55, %c1_56, %c0_57, %c0_58], %66 {strides = array<i32>} : memref<1x4x8x8xbf16, #tpu.memory_space<vmem>>, vector<1x1x8x8xbf16>,
    %67 = vector.extract_strided_slice %58 {offsets = [0, 16], sizes = [8, 8], strides = [1, 1]} : vector<8x32xbf16> to vector<8x8xbf16>
    %c0_59 = arith.constant 0 : index
    %c2_60 = arith.constant 2 : index
    %c0_61 = arith.constant 0 : index
    %c0_62 = arith.constant 0 : index
    %68 = vector.load %arg13[%c0_59, %c2_60, %c0_61, %c0_62] : memref<1x4x8x8xbf16, #tpu.memory_space<vmem>>, vector<1x1x8x8xbf16>
    %69 = vector.shape_cast %68 : vector<1x1x8x8xbf16> to vector<8x8xbf16>
    %70 = vector.shape_cast %67 : vector<8x8xbf16> to vector<1x1x8x8xbf16>
    tpu.vector_store %arg13[%c0_59, %c2_60, %c0_61, %c0_62], %70 {strides = array<i32>} : memref<1x4x8x8xbf16, #tpu.memory_space<vmem>>, vector<1x1x8x8xbf16>,
    %71 = vector.extract_strided_slice %58 {offsets = [0, 24], sizes = [8, 8], strides = [1, 1]} : vector<8x32xbf16> to vector<8x8xbf16>
    %c0_63 = arith.constant 0 : index
    %c3_64 = arith.constant 3 : index
    %c0_65 = arith.constant 0 : index
    %c0_66 = arith.constant 0 : index
    %72 = vector.load %arg13[%c0_63, %c3_64, %c0_65, %c0_66] : memref<1x4x8x8xbf16, #tpu.memory_space<vmem>>, vector<1x1x8x8xbf16>
    %73 = vector.shape_cast %72 : vector<1x1x8x8xbf16> to vector<8x8xbf16>
    %74 = vector.shape_cast %71 : vector<8x8xbf16> to vector<1x1x8x8xbf16>
    tpu.vector_store %arg13[%c0_63, %c3_64, %c0_65, %c0_66], %74 {strides = array<i32>} : memref<1x4x8x8xbf16, #tpu.memory_space<vmem>>, vector<1x1x8x8xbf16>,
    return
  }
  func.func @transform_0(%arg0: i32, %arg1: i32) -> (i32, i32, i32) {
    %c0_i32 = arith.constant 0 : i32
    %c0_i32_0 = arith.constant 0 : i32
    return %arg0, %arg1, %c0_i32 : i32, i32, i32
  }
  func.func @transform_1(%arg0: i32, %arg1: i32) -> (i32, i32, i32) {
    %c0_i32 = arith.constant 0 : i32
    %c0_i32_0 = arith.constant 0 : i32
    return %arg0, %arg1, %c0_i32 : i32, i32, i32
  }
  func.func @transform_2(%arg0: i32, %arg1: i32) -> (i32, i32, i32) {
    %c0_i32 = arith.constant 0 : i32
    %c0_i32_0 = arith.constant 0 : i32
    return %arg0, %arg1, %c0_i32 : i32, i32, i32
  }
  func.func @transform_3(%arg0: i32, %arg1: i32) -> (i32, i32) {
    %c0_i32 = arith.constant 0 : i32
    %c0_i32_0 = arith.constant 0 : i32
    %c0_i32_1 = arith.constant 0 : i32
    return %c0_i32, %c0_i32_0 : i32, i32
  }
  func.func @transform_4(%arg0: i32, %arg1: i32) -> (i32, i32) {
    %c0_i32 = arith.constant 0 : i32
    %c0_i32_0 = arith.constant 0 : i32
    %c0_i32_1 = arith.constant 0 : i32
    return %c0_i32, %c0_i32_0 : i32, i32
  }
  func.func @transform_5(%arg0: i32, %arg1: i32) -> (i32, i32) {
    %c0_i32 = arith.constant 0 : i32
    %c0_i32_0 = arith.constant 0 : i32
    %c0_i32_1 = arith.constant 0 : i32
    return %c0_i32, %c0_i32_0 : i32, i32
  }
  func.func @transform_6(%arg0: i32, %arg1: i32) -> (i32, i32) {
    %c0_i32 = arith.constant 0 : i32
    %c0_i32_0 = arith.constant 0 : i32
    %c0_i32_1 = arith.constant 0 : i32
    return %c0_i32, %c0_i32_0 : i32, i32
  }
  func.func @transform_7(%arg0: i32, %arg1: i32) -> (i32, i32) {
    %c0_i32 = arith.constant 0 : i32
    %c0_i32_0 = arith.constant 0 : i32
    %c0_i32_1 = arith.constant 0 : i32
    return %c0_i32, %c0_i32_0 : i32, i32
  }
  func.func @transform_8(%arg0: i32, %arg1: i32) -> (i32, i32) {
    %c0_i32 = arith.constant 0 : i32
    %c0_i32_0 = arith.constant 0 : i32
    %c0_i32_1 = arith.constant 0 : i32
    return %c0_i32, %c0_i32_0 : i32, i32
  }
  func.func @transform_9(%arg0: i32, %arg1: i32) -> (i32, i32, i32, i32) {
    %c0_i32 = arith.constant 0 : i32
    %c0_i32_0 = arith.constant 0 : i32
    %c0_i32_1 = arith.constant 0 : i32
    return %arg0, %c0_i32, %arg1, %c0_i32_0 : i32, i32, i32, i32
  }
  func.func @transform_10(%arg0: i32, %arg1: i32) -> (i32, i32, i32, i32) {
    %c0_i32 = arith.constant 0 : i32
    %c0_i32_0 = arith.constant 0 : i32
    %c0_i32_1 = arith.constant 0 : i32
    return %arg0, %c0_i32, %arg1, %c0_i32_0 : i32, i32, i32, i32
  }
  func.func @transform_11(%arg0: i32, %arg1: i32) -> (i32, i32, i32, i32) {
    %c0_i32 = arith.constant 0 : i32
    %c0_i32_0 = arith.constant 0 : i32
    %c0_i32_1 = arith.constant 0 : i32
    return %arg0, %c0_i32, %arg1, %c0_i32_0 : i32, i32, i32, i32
  }
}

</mosaic_0001>

<llo_original>
// kernel: tpu_custom_call.1
$region0: #{tpu_custom_call.1}
  #allocation0 [shape = 'u32[]', space=smem, size = 0x4, offset = 0x4, fixed_abs, tag = 'smem constant byte address 0x4 - core index']
  #allocation1 [shape = 'u32[144,128]{1,0:T(1,128)}', space=vmem, size = 0x12000, scoped, tag = 'internal scratch']
  %s0 = inlined_call_operand.hbm [shape: f32[2,8,32], index: 0, kind: input, shape index: {}]
  %s1 = inlined_call_operand.hbm [shape: f32[2,8,32], index: 1, kind: input, shape index: {}]
  %s2 = inlined_call_operand.hbm [shape: f32[2,8,32], index: 2, kind: input, shape index: {}]
  %s3 = inlined_call_operand.hbm [shape: bf16[32,32], index: 3, kind: input, shape index: {}]
  %s4 = inlined_call_operand.hbm [shape: bf16[32,32], index: 4, kind: input, shape index: {}]
  %s5 = inlined_call_operand.hbm [shape: bf16[32,32], index: 5, kind: input, shape index: {}]
  %s6 = inlined_call_operand.hbm [shape: f32[1,32], index: 6, kind: input, shape index: {}]
  %s7 = inlined_call_operand.hbm [shape: f32[1,32], index: 7, kind: input, shape index: {}]
  %s8 = inlined_call_operand.hbm [shape: f32[1,32], index: 8, kind: input, shape index: {}]
  %s9 = inlined_call_operand.hbm [shape: bf16[2,4,8,8], index: 9, kind: output, shape index: {0}]
  %s10 = inlined_call_operand.hbm [shape: bf16[2,4,8,8], index: 10, kind: output, shape index: {1}]
  %s11 = inlined_call_operand.hbm [shape: bf16[2,4,8,8], index: 11, kind: output, shape index: {2}]
  %12 = xla_tuple %s9, %s10, %s11
  %s13 = sld [smem:[#allocation0]]
  $region121: #{tpu_custom_call.1} parent=0
    _
  %s15 = ssub.s32 1, %s13
  %s16 = scalar_select 0, %s15, %s13
  $region1: #{tpu_custom_call.1} parent=0
    #allocation2 [shape = 'u8[8192]{0}', space=vmem, size = 0x2000, scoped, tag = 'input window, operand 0']
    #allocation3 [shape = 's32[2]{0}', space=sflag, size = 0x8, scoped, tag = 'scoped memory for tpu_custom_call.1']
    #allocation4 [shape = 's32[2]{0}', space=sflag, size = 0x8, scoped, tag = 'scoped memory for tpu_custom_call.1']
    #allocation5 [shape = 'u8[8192]{0}', space=vmem, size = 0x2000, scoped, tag = 'input window, operand 1']
    #allocation6 [shape = 's32[2]{0}', space=sflag, size = 0x8, scoped, tag = 'scoped memory for tpu_custom_call.1']
    #allocation7 [shape = 'u8[8192]{0}', space=vmem, size = 0x2000, scoped, tag = 'input window, operand 2']
    #allocation8 [shape = 'u8[8192]{0}', space=vmem, size = 0x2000, scoped, tag = 'input window, operand 3, single buffered']
    #allocation9 [shape = 's32[1]{0}', space=sflag, size = 0x4, scoped, tag = 'scoped memory for tpu_custom_call.1']
    #allocation10 [shape = 'u8[8192]{0}', space=vmem, size = 0x2000, scoped, tag = 'input window, operand 4, single buffered']
    #allocation11 [shape = 'u8[8192]{0}', space=vmem, size = 0x2000, scoped, tag = 'input window, operand 5, single buffered']
    #allocation12 [shape = 's32[1]{0}', space=sflag, size = 0x4, scoped, tag = 'scoped memory for tpu_custom_call.1']
    #allocation13 [shape = 'u8[512]{0}', space=vmem, size = 0x400, scoped, tag = 'input window, operand 6, single buffered']
    #allocation14 [shape = 'u8[512]{0}', space=vmem, size = 0x400, scoped, tag = 'input window, operand 7, single buffered']
    #allocation15 [shape = 's32[1]{0}', space=sflag, size = 0x4, scoped, tag = 'scoped memory for tpu_custom_call.1']
    #allocation16 [shape = 'u8[512]{0}', space=vmem, size = 0x400, scoped, tag = 'input window, operand 8, single buffered']
    #allocation17 [shape = 'u8[16384]{0}', space=vmem, size = 0x4000, scoped, tag = 'output window, operand 0']
    #allocation18 [shape = 'u8[16384]{0}', space=vmem, size = 0x4000, scoped, tag = 'output window, operand 1']
    #allocation19 [shape = 's32[2]{0}', space=sflag, size = 0x8, scoped, tag = 'scoped memory for tpu_custom_call.1']
    #allocation20 [shape = 'u8[16384]{0}', space=vmem, size = 0x4000, scoped, tag = 'output window, operand 2']
    %17 = vsyncpa [#allocation3], 0
    %s18 = scalar_lea.sflag [#allocation3], 1
    %19 = vsyncpa %s18, 0
    %20 = vsyncpa [#allocation6], 0
    %s21 = scalar_lea.sflag [#allocation6], 1
    %22 = vsyncpa %s21, 0
    %23 = vsyncpa [#allocation9], 0
    %24 = vsyncpa [#allocation12], 0
    %25 = vsyncpa [#allocation15], 0
    %26 = vsyncpa [#allocation4], 0
    %s27 = scalar_lea.sflag [#allocation4], 1
    %28 = vsyncpa %s27, 0
    %29 = vsyncpa [#allocation19], 0
    %s30 = scalar_lea.sflag [#allocation19], 1
    %31 = vsyncpa %s30, 0
    loop: start=0, step=1, limit=4
    $region2: #{tpu_custom_call.1} parent=1 // loop_pre_header
      _
    $region3: #{tpu_custom_call.1} parent=1 // loop_header
      %s33 = sphi 0, %s37
      %p34 = scmp.ge.s32.totalorder %s33, 4
      %s40 = sphi 0, %s52
      %s41 = sphi 0, %s48
      %s42 = sphi 0, %s40
      %s43 = sphi 0, %s41
      %s44 = sphi 0, %s42
      %s45 = sphi 0, %s43
      %s57 = sphi 0, %s59
      %s60 = sphi 0, %s57
      %s61 = sphi 0, %s60
      %s77 = sphi 0, %s61
      %s85 = sphi 0, %s87
      %s88 = sphi 0, %s85
      %s89 = sphi 0, %s88
      %s105 = sphi 0, %s89
      %s113 = sphi 0, %s115
      %s116 = sphi 0, %s113
      %s117 = sphi 0, %s116
      %s133 = sphi 0, %s117
      %s137 = sphi 0, %s137
      %s139 = sphi 0, %s137
      %s140 = sphi 0, %s139
      %s154 = sphi 0, %s140
      %s158 = sphi 0, %s158
      %s160 = sphi 0, %s158
      %s161 = sphi 0, %s160
      %s175 = sphi 0, %s161
      %s179 = sphi 0, %s179
      %s181 = sphi 0, %s179
      %s182 = sphi 0, %s181
      %s196 = sphi 0, %s182
      %s200 = sphi 0, %s200
      %s202 = sphi 0, %s200
      %s203 = sphi 0, %s202
      %s217 = sphi 0, %s203
      %s221 = sphi 0, %s221
      %s223 = sphi 0, %s221
      %s224 = sphi 0, %s223
      %s238 = sphi 0, %s224
      %s242 = sphi 0, %s242
      %s244 = sphi 0, %s242
      %s245 = sphi 0, %s244
      %s259 = sphi 0, %s245
      %s267 = sphi 0, %s269
      %s270 = sphi 0, %s267
      %s271 = sphi 0, %s270
      %s287 = sphi 0, %s271
      %s295 = sphi 0, %s297
      %s298 = sphi 0, %s295
      %s299 = sphi 0, %s298
      %s315 = sphi 0, %s299
      %s323 = sphi 0, %s325
      %s326 = sphi 0, %s323
      %s327 = sphi 0, %s326
      %s343 = sphi 0, %s327
    $region4: #{tpu_custom_call.1} parent=1 // loop_header_branch
      %36 = sbr.rel (%p34) target = $region8
    $region5: #{tpu_custom_call.1} parent=1 // loop_body
      %s38 = ssub.s32 %s33, 1
      %s39 = ssub.s32 %s33, 2
      %s46 = sadd.s32 1, %s41
      %p47 = scmp.ge.s32.totalorder %s46, 1
      %s48 = scalar_select %p47, 0, %s46
      %s49 = sadd.s32 1, %s40
      %s50 = scalar_select %p47, %s49, %s40
      %p51 = scmp.ge.s32.totalorder %s50, 2
      %s52 = scalar_select %p51, 0, %s50
      %s53 = ssub.s32 %s40, %s52
      %s54 = ssub.s32 %s41, %s48
      %s55 = sor.u32 %s53, %s54
      %p56 = scmp.eq.s32.totalorder %s55, 0
      %s58 = sadd.s32 %s57, 1
      %s59 = scalar_select %p56, %s57, %s58
      %p62 = pneg %p56
      %p63 = scmp.eq.s32.totalorder %s33, 1
      %p64 = por %p62, %p63
      %p65 = scmp.ne.s32.totalorder %s57, %s60
      %p66 = scmp.eq.s32.totalorder %s33, 0
      %p67 = por %p65, %p66
      %p68 = scmp.ne.s32.totalorder %s57, %s60
      %p69 = scmp.eq.s32.totalorder %s38, 1
      %p70 = por %p68, %p69
      %p71 = scmp.ne.s32.totalorder %s60, %s61
      %p72 = scmp.eq.s32.totalorder %s38, 0
      %p73 = por %p71, %p72
      %p74 = scmp.ne.s32.totalorder %s60, %s61
      %p75 = scmp.eq.s32.totalorder %s39, 1
      %p76 = por %p74, %p75
      %p78 = scmp.ne.s32.totalorder %s61, %s77
      %p79 = scmp.eq.s32.totalorder %s39, 0
      %p80 = por %p78, %p79
      %s81 = ssub.s32 %s40, %s52
      %s82 = ssub.s32 %s41, %s48
      %s83 = sor.u32 %s81, %s82
      %p84 = scmp.eq.s32.totalorder %s83, 0
      %s86 = sadd.s32 %s85, 1
      %s87 = scalar_select %p84, %s85, %s86
      %p90 = pneg %p84
      %p91 = scmp.eq.s32.totalorder %s33, 1
      %p92 = por %p90, %p91
      %p93 = scmp.ne.s32.totalorder %s85, %s88
      %p94 = scmp.eq.s32.totalorder %s33, 0
      %p95 = por %p93, %p94
      %p96 = scmp.ne.s32.totalorder %s85, %s88
      %p97 = scmp.eq.s32.totalorder %s38, 1
      %p98 = por %p96, %p97
      %p99 = scmp.ne.s32.totalorder %s88, %s89
      %p100 = scmp.eq.s32.totalorder %s38, 0
      %p101 = por %p99, %p100
      %p102 = scmp.ne.s32.totalorder %s88, %s89
      %p103 = scmp.eq.s32.totalorder %s39, 1
      %p104 = por %p102, %p103
      %p106 = scmp.ne.s32.totalorder %s89, %s105
      %p107 = scmp.eq.s32.totalorder %s39, 0
      %p108 = por %p106, %p107
      %s109 = ssub.s32 %s40, %s52
      %s110 = ssub.s32 %s41, %s48
      %s111 = sor.u32 %s109, %s110
      %p112 = scmp.eq.s32.totalorder %s111, 0
      %s114 = sadd.s32 %s113, 1
      %s115 = scalar_select %p112, %s113, %s114
      %p118 = pneg %p112
      %p119 = scmp.eq.s32.totalorder %s33, 1
      %p120 = por %p118, %p119
      %p121 = scmp.ne.s32.totalorder %s113, %s116
      %p122 = scmp.eq.s32.totalorder %s33, 0
      %p123 = por %p121, %p122
      %p124 = scmp.ne.s32.totalorder %s113, %s116
      %p125 = scmp.eq.s32.totalorder %s38, 1
      %p126 = por %p124, %p125
      %p127 = scmp.ne.s32.totalorder %s116, %s117
      %p128 = scmp.eq.s32.totalorder %s38, 0
      %p129 = por %p127, %p128
      %p130 = scmp.ne.s32.totalorder %s116, %s117
      %p131 = scmp.eq.s32.totalorder %s39, 1
      %p132 = por %p130, %p131
      %p134 = scmp.ne.s32.totalorder %s117, %s133
      %p135 = scmp.eq.s32.totalorder %s39, 0
      %p136 = por %p134, %p135
      %s138 = sadd.s32 %s137, 1
      %p141 = scmp.eq.s32.totalorder %s33, 1
      %p142 = scmp.ne.s32.totalorder %s137, %s139
      %p143 = scmp.eq.s32.totalorder %s33, 0
      %p144 = por %p142, %p143
      %p145 = scmp.ne.s32.totalorder %s137, %s139
      %p146 = scmp.eq.s32.totalorder %s38, 1
      %p147 = por %p145, %p146
      %p148 = scmp.ne.s32.totalorder %s139, %s140
      %p149 = scmp.eq.s32.totalorder %s38, 0
      %p150 = por %p148, %p149
      %p151 = scmp.ne.s32.totalorder %s139, %s140
      %p152 = scmp.eq.s32.totalorder %s39, 1
      %p153 = por %p151, %p152
      %p155 = scmp.ne.s32.totalorder %s140, %s154
      %p156 = scmp.eq.s32.totalorder %s39, 0
      %p157 = por %p155, %p156
      %s159 = sadd.s32 %s158, 1
      %p162 = scmp.eq.s32.totalorder %s33, 1
      %p163 = scmp.ne.s32.totalorder %s158, %s160
      %p164 = scmp.eq.s32.totalorder %s33, 0
      %p165 = por %p163, %p164
      %p166 = scmp.ne.s32.totalorder %s158, %s160
      %p167 = scmp.eq.s32.totalorder %s38, 1
      %p168 = por %p166, %p167
      %p169 = scmp.ne.s32.totalorder %s160, %s161
      %p170 = scmp.eq.s32.totalorder %s38, 0
      %p171 = por %p169, %p170
      %p172 = scmp.ne.s32.totalorder %s160, %s161
      %p173 = scmp.eq.s32.totalorder %s39, 1
      %p174 = por %p172, %p173
      %p176 = scmp.ne.s32.totalorder %s161, %s175
      %p177 = scmp.eq.s32.totalorder %s39, 0
      %p178 = por %p176, %p177
      %s180 = sadd.s32 %s179, 1
      %p183 = scmp.eq.s32.totalorder %s33, 1
      %p184 = scmp.ne.s32.totalorder %s179, %s181
      %p185 = scmp.eq.s32.totalorder %s33, 0
      %p186 = por %p184, %p185
      %p187 = scmp.ne.s32.totalorder %s179, %s181
      %p188 = scmp.eq.s32.totalorder %s38, 1
      %p189 = por %p187, %p188
      %p190 = scmp.ne.s32.totalorder %s181, %s182
      %p191 = scmp.eq.s32.totalorder %s38, 0
      %p192 = por %p190, %p191
      %p193 = scmp.ne.s32.totalorder %s181, %s182
      %p194 = scmp.eq.s32.totalorder %s39, 1
      %p195 = por %p193, %p194
      %p197 = scmp.ne.s32.totalorder %s182, %s196
      %p198 = scmp.eq.s32.totalorder %s39, 0
      %p199 = por %p197, %p198
      %s201 = sadd.s32 %s200, 1
      %p204 = scmp.eq.s32.totalorder %s33, 1
      %p205 = scmp.ne.s32.totalorder %s200, %s202
      %p206 = scmp.eq.s32.totalorder %s33, 0
      %p207 = por %p205, %p206
      %p208 = scmp.ne.s32.totalorder %s200, %s202
      %p209 = scmp.eq.s32.totalorder %s38, 1
      %p210 = por %p208, %p209
      %p211 = scmp.ne.s32.totalorder %s202, %s203
      %p212 = scmp.eq.s32.totalorder %s38, 0
      %p213 = por %p211, %p212
      %p214 = scmp.ne.s32.totalorder %s202, %s203
      %p215 = scmp.eq.s32.totalorder %s39, 1
      %p216 = por %p214, %p215
      %p218 = scmp.ne.s32.totalorder %s203, %s217
      %p219 = scmp.eq.s32.totalorder %s39, 0
      %p220 = por %p218, %p219
      %s222 = sadd.s32 %s221, 1
      %p225 = scmp.eq.s32.totalorder %s33, 1
      %p226 = scmp.ne.s32.totalorder %s221, %s223
      %p227 = scmp.eq.s32.totalorder %s33, 0
      %p228 = por %p226, %p227
      %p229 = scmp.ne.s32.totalorder %s221, %s223
      %p230 = scmp.eq.s32.totalorder %s38, 1
      %p231 = por %p229, %p230
      %p232 = scmp.ne.s32.totalorder %s223, %s224
      %p233 = scmp.eq.s32.totalorder %s38, 0
      %p234 = por %p232, %p233
      %p235 = scmp.ne.s32.totalorder %s223, %s224
      %p236 = scmp.eq.s32.totalorder %s39, 1
      %p237 = por %p235, %p236
      %p239 = scmp.ne.s32.totalorder %s224, %s238
      %p240 = scmp.eq.s32.totalorder %s39, 0
      %p241 = por %p239, %p240
      %s243 = sadd.s32 %s242, 1
      %p246 = scmp.eq.s32.totalorder %s33, 1
      %p247 = scmp.ne.s32.totalorder %s242, %s244
      %p248 = scmp.eq.s32.totalorder %s33, 0
      %p249 = por %p247, %p248
      %p250 = scmp.ne.s32.totalorder %s242, %s244
      %p251 = scmp.eq.s32.totalorder %s38, 1
      %p252 = por %p250, %p251
      %p253 = scmp.ne.s32.totalorder %s244, %s245
      %p254 = scmp.eq.s32.totalorder %s38, 0
      %p255 = por %p253, %p254
      %p256 = scmp.ne.s32.totalorder %s244, %s245
      %p257 = scmp.eq.s32.totalorder %s39, 1
      %p258 = por %p256, %p257
      %p260 = scmp.ne.s32.totalorder %s245, %s259
      %p261 = scmp.eq.s32.totalorder %s39, 0
      %p262 = por %p260, %p261
      %s263 = ssub.s32 %s40, %s52
      %s264 = ssub.s32 %s41, %s48
      %s265 = sor.u32 %s263, %s264
      %p266 = scmp.eq.s32.totalorder %s265, 0
      %s268 = sadd.s32 %s267, 1
      %s269 = scalar_select %p266, %s267, %s268
      %p272 = pneg %p266
      %p273 = scmp.eq.s32.totalorder %s33, 1
      %p274 = por %p272, %p273
      %p275 = scmp.ne.s32.totalorder %s267, %s270
      %p276 = scmp.eq.s32.totalorder %s33, 0
      %p277 = por %p275, %p276
      %p278 = scmp.ne.s32.totalorder %s267, %s270
      %p279 = scmp.eq.s32.totalorder %s38, 1
      %p280 = por %p278, %p279
      %p281 = scmp.ne.s32.totalorder %s270, %s271
      %p282 = scmp.eq.s32.totalorder %s38, 0
      %p283 = por %p281, %p282
      %p284 = scmp.ne.s32.totalorder %s270, %s271
      %p285 = scmp.eq.s32.totalorder %s39, 1
      %p286 = por %p284, %p285
      %p288 = scmp.ne.s32.totalorder %s271, %s287
      %p289 = scmp.eq.s32.totalorder %s39, 0
      %p290 = por %p288, %p289
      %s291 = ssub.s32 %s40, %s52
      %s292 = ssub.s32 %s41, %s48
      %s293 = sor.u32 %s291, %s292
      %p294 = scmp.eq.s32.totalorder %s293, 0
      %s296 = sadd.s32 %s295, 1
      %s297 = scalar_select %p294, %s295, %s296
      %p300 = pneg %p294
      %p301 = scmp.eq.s32.totalorder %s33, 1
      %p302 = por %p300, %p301
      %p303 = scmp.ne.s32.totalorder %s295, %s298
      %p304 = scmp.eq.s32.totalorder %s33, 0
      %p305 = por %p303, %p304
      %p306 = scmp.ne.s32.totalorder %s295, %s298
      %p307 = scmp.eq.s32.totalorder %s38, 1
      %p308 = por %p306, %p307
      %p309 = scmp.ne.s32.totalorder %s298, %s299
      %p310 = scmp.eq.s32.totalorder %s38, 0
      %p311 = por %p309, %p310
      %p312 = scmp.ne.s32.totalorder %s298, %s299
      %p313 = scmp.eq.s32.totalorder %s39, 1
      %p314 = por %p312, %p313
      %p316 = scmp.ne.s32.totalorder %s299, %s315
      %p317 = scmp.eq.s32.totalorder %s39, 0
      %p318 = por %p316, %p317
      %s319 = ssub.s32 %s40, %s52
      %s320 = ssub.s32 %s41, %s48
      %s321 = sor.u32 %s319, %s320
      %p322 = scmp.eq.s32.totalorder %s321, 0
      %s324 = sadd.s32 %s323, 1
      %s325 = scalar_select %p322, %s323, %s324
      %p328 = pneg %p322
      %p329 = scmp.eq.s32.totalorder %s33, 1
      %p330 = por %p328, %p329
      %p331 = scmp.ne.s32.totalorder %s323, %s326
      %p332 = scmp.eq.s32.totalorder %s33, 0
      %p333 = por %p331, %p332
      %p334 = scmp.ne.s32.totalorder %s323, %s326
      %p335 = scmp.eq.s32.totalorder %s38, 1
      %p336 = por %p334, %p335
      %p337 = scmp.ne.s32.totalorder %s326, %s327
      %p338 = scmp.eq.s32.totalorder %s38, 0
      %p339 = por %p337, %p338
      %p340 = scmp.ne.s32.totalorder %s326, %s327
      %p341 = scmp.eq.s32.totalorder %s39, 1
      %p342 = por %p340, %p341
      %p344 = scmp.ne.s32.totalorder %s327, %s343
      %p345 = scmp.eq.s32.totalorder %s39, 0
      %p346 = por %p344, %p345
      %p347 = scmp.le.s32.totalorder 1, %s33
      %p348 = scmp.lt.s32.totalorder %s33, 3
      %p349 = pnand %p347, %p348
      %p350 = pneg %p349
      // Predicated region
      $region9: #{tpu_custom_call.1} parent=5 // pred_check
        _
      $region10: #{tpu_custom_call.1} parent=5 // pred_check_branch
        %352 = sbr.rel (%p349) target = $region12
      $region11: #{tpu_custom_call.1} parent=5 // pred_region
        %s353 = ssub.s32 %s33, 1
        // Predicated region
        $region13: #{tpu_custom_call.1} parent=11 // pred_check
          %p354 = pneg %p150
        $region14: #{tpu_custom_call.1} parent=11 // pred_check_branch
          %356 = sbr.rel (%p354) target = $region16
        $region15: #{tpu_custom_call.1} parent=11 // pred_region
          %s358 = ssub.s32 256, 256
          %359 = vsyncadd [#allocation9], %s358
          %s360 = sshll.u32 [#allocation8], 4
          %s361 = int_to_ptr.vmem [resolvable:$true] %s360
          %366 = dma.hbm_to_vmem [thread:$0]  %s3, 256, %s361, [#allocation9], 64, 64, 4
        $region16: #{tpu_custom_call.1} parent=11 // pred_fallthru
          _
        // Predicated region
        $region17: #{tpu_custom_call.1} parent=11 // pred_check
          %p367 = pneg %p171
        $region18: #{tpu_custom_call.1} parent=11 // pred_check_branch
          %369 = sbr.rel (%p367) target = $region20
        $region19: #{tpu_custom_call.1} parent=11 // pred_region
          %s371 = ssub.s32 256, 256
          %372 = vsyncadd [#allocation9], %s371
          %s373 = sshll.u32 [#allocation10], 4
          %s374 = int_to_ptr.vmem [resolvable:$true] %s373
          %379 = dma.hbm_to_vmem [thread:$0]  %s4, 256, %s374, [#allocation9], 64, 64, 4
        $region20: #{tpu_custom_call.1} parent=11 // pred_fallthru
          _
        // Predicated region
        $region21: #{tpu_custom_call.1} parent=11 // pred_check
          %p380 = pneg %p192
        $region22: #{tpu_custom_call.1} parent=11 // pred_check_branch
          %382 = sbr.rel (%p380) target = $region24
        $region23: #{tpu_custom_call.1} parent=11 // pred_region
          %s384 = ssub.s32 256, 256
          %385 = vsyncadd [#allocation12], %s384
          %s386 = sshll.u32 [#allocation11], 4
          %s387 = int_to_ptr.vmem [resolvable:$true] %s386
          %392 = dma.hbm_to_vmem [thread:$0]  %s5, 256, %s387, [#allocation12], 64, 64, 4
        $region24: #{tpu_custom_call.1} parent=11 // pred_fallthru
          _
        // Predicated region
        $region25: #{tpu_custom_call.1} parent=11 // pred_check
          %p393 = pneg %p213
        $region26: #{tpu_custom_call.1} parent=11 // pred_check_branch
          %395 = sbr.rel (%p393) target = $region28
        $region27: #{tpu_custom_call.1} parent=11 // pred_region
          %s397 = ssub.s32 16, 16
          %398 = vsyncadd [#allocation12], %s397
          %s400 = sshll.u32 [#allocation13], 4
          %s401 = int_to_ptr.vmem [resolvable:$true] %s400
          %403 = dma.hbm_to_vmem [thread:$0]  %s6, 16, %s401, [#allocation12]
        $region28: #{tpu_custom_call.1} parent=11 // pred_fallthru
          _
        // Predicated region
        $region29: #{tpu_custom_call.1} parent=11 // pred_check
          %p404 = pneg %p234
        $region30: #{tpu_custom_call.1} parent=11 // pred_check_branch
          %406 = sbr.rel (%p404) target = $region32
        $region31: #{tpu_custom_call.1} parent=11 // pred_region
          %s408 = ssub.s32 16, 16
          %409 = vsyncadd [#allocation15], %s408
          %s411 = sshll.u32 [#allocation14], 4
          %s412 = int_to_ptr.vmem [resolvable:$true] %s411
          %414 = dma.hbm_to_vmem [thread:$0]  %s7, 16, %s412, [#allocation15]
        $region32: #{tpu_custom_call.1} parent=11 // pred_fallthru
          _
        // Predicated region
        $region33: #{tpu_custom_call.1} parent=11 // pred_check
          %p415 = pneg %p255
        $region34: #{tpu_custom_call.1} parent=11 // pred_check_branch
          %417 = sbr.rel (%p415) target = $region36
        $region35: #{tpu_custom_call.1} parent=11 // pred_region
          %s419 = ssub.s32 16, 16
          %420 = vsyncadd [#allocation15], %s419
          %s422 = sshll.u32 [#allocation16], 4
          %s423 = int_to_ptr.vmem [resolvable:$true] %s422
          %425 = dma.hbm_to_vmem [thread:$0]  %s8, 16, %s423, [#allocation15]
        $region36: #{tpu_custom_call.1} parent=11 // pred_fallthru
          _
      $region12: #{tpu_custom_call.1} parent=5 // pred_fallthru
        _
      %p426 = scmp.lt.s32.totalorder %s33, 2
      // Predicated region
      $region37: #{tpu_custom_call.1} parent=5 // pred_check
        %p427 = pneg %p426
      $region38: #{tpu_custom_call.1} parent=5 // pred_check_branch
        %429 = sbr.rel (%p427) target = $region40
      $region39: #{tpu_custom_call.1} parent=5 // pred_region
        // Predicated region
        $region41: #{tpu_custom_call.1} parent=39 // pred_check
          %p430 = pneg %p67
        $region42: #{tpu_custom_call.1} parent=39 // pred_check_branch
          %432 = sbr.rel (%p430) target = $region44
        $region43: #{tpu_custom_call.1} parent=39 // pred_region
          %s433 = sand.u32 %s57, 1
          %s434 = scalar_lea.sflag [#allocation3], %s433
          %s435 = sand.u32 %s57, 1
          %s436 = smul.addr %s435, 8
          %s437 = scalar_lea.vmem [#allocation2], %s436
          %s439 = ssub.s32 128, 128
          %440 = vsyncadd %s434, %s439
          %s441 = sadd.s32 %s41, %s40
          %s442 = smul.addr %s441, 128
          %s443 = scalar_lea.hbm %s0, %s442
          %s445 = sshll.u32 %s437, 4
          %s446 = int_to_ptr.vmem [resolvable:$true] %s445
          %448 = dma.hbm_to_vmem [thread:$0]  %s443, 128, %s446, %s434
        $region44: #{tpu_custom_call.1} parent=39 // pred_fallthru
          _
        // Predicated region
        $region45: #{tpu_custom_call.1} parent=39 // pred_check
          %p449 = pneg %p95
        $region46: #{tpu_custom_call.1} parent=39 // pred_check_branch
          %451 = sbr.rel (%p449) target = $region48
        $region47: #{tpu_custom_call.1} parent=39 // pred_region
          %s452 = sand.u32 %s33, 1
          %s453 = scalar_lea.sflag [#allocation6], %s452
          %s454 = sand.u32 %s85, 1
          %s455 = smul.addr %s454, 8
          %s456 = scalar_lea.vmem [#allocation5], %s455
          %s458 = ssub.s32 128, 128
          %459 = vsyncadd %s453, %s458
          %s460 = sadd.s32 %s41, %s40
          %s461 = smul.addr %s460, 128
          %s462 = scalar_lea.hbm %s1, %s461
          %s464 = sshll.u32 %s456, 4
          %s465 = int_to_ptr.vmem [resolvable:$true] %s464
          %467 = dma.hbm_to_vmem [thread:$0]  %s462, 128, %s465, %s453
        $region48: #{tpu_custom_call.1} parent=39 // pred_fallthru
          _
        // Predicated region
        $region49: #{tpu_custom_call.1} parent=39 // pred_check
          %p468 = pneg %p123
        $region50: #{tpu_custom_call.1} parent=39 // pred_check_branch
          %470 = sbr.rel (%p468) target = $region52
        $region51: #{tpu_custom_call.1} parent=39 // pred_region
          %s471 = sand.u32 %s33, 1
          %s472 = scalar_lea.sflag [#allocation6], %s471
          %s473 = sand.u32 %s113, 1
          %s474 = smul.addr %s473, 8
          %s475 = scalar_lea.vmem [#allocation7], %s474
          %s477 = ssub.s32 128, 128
          %478 = vsyncadd %s472, %s477
          %s479 = sadd.s32 %s41, %s40
          %s480 = smul.addr %s479, 128
          %s481 = scalar_lea.hbm %s2, %s480
          %s483 = sshll.u32 %s475, 4
          %s484 = int_to_ptr.vmem [resolvable:$true] %s483
          %486 = dma.hbm_to_vmem [thread:$0]  %s481, 128, %s484, %s472
        $region52: #{tpu_custom_call.1} parent=39 // pred_fallthru
          _
      $region40: #{tpu_custom_call.1} parent=5 // pred_fallthru
        _
      %p487 = scmp.le.s32.totalorder 1, %s33
      %p488 = scmp.lt.s32.totalorder %s33, 3
      %p489 = pnand %p487, %p488
      %p490 = pneg %p489
      // Predicated region
      $region53: #{tpu_custom_call.1} parent=5 // pred_check
        _
      $region54: #{tpu_custom_call.1} parent=5 // pred_check_branch
        %492 = sbr.rel (%p489) target = $region56
      $region55: #{tpu_custom_call.1} parent=5 // pred_region
        %s493 = ssub.s32 %s33, 1
        %s494 = sand.u32 %s60, 1
        %s495 = scalar_lea.sflag [#allocation3], %s494
        %s496 = sand.u32 %s60, 1
        %s497 = smul.addr %s496, 8
        %s498 = scalar_lea.vmem [#allocation2], %s497
        // Predicated region
        $region57: #{tpu_custom_call.1} parent=55 // pred_check
          %p499 = pneg %p73
        $region58: #{tpu_custom_call.1} parent=55 // pred_check_branch
          %501 = sbr.rel (%p499) target = $region60
        $region59: #{tpu_custom_call.1} parent=55 // pred_region
          %502 = dma.done %s495, 128
        $region60: #{tpu_custom_call.1} parent=55 // pred_fallthru
          _
        %s503 = sand.u32 %s38, 1
        %s504 = scalar_lea.sflag [#allocation6], %s503
        %s505 = sand.u32 %s88, 1
        %s506 = smul.addr %s505, 8
        %s507 = scalar_lea.vmem [#allocation5], %s506
        // Predicated region
        $region61: #{tpu_custom_call.1} parent=55 // pred_check
          %p508 = pneg %p101
        $region62: #{tpu_custom_call.1} parent=55 // pred_check_branch
          %510 = sbr.rel (%p508) target = $region64
        $region63: #{tpu_custom_call.1} parent=55 // pred_region
          %511 = dma.done %s504, 128
        $region64: #{tpu_custom_call.1} parent=55 // pred_fallthru
          _
        %s512 = sand.u32 %s38, 1
        %s513 = scalar_lea.sflag [#allocation6], %s512
        %s514 = sand.u32 %s116, 1
        %s515 = smul.addr %s514, 8
        %s516 = scalar_lea.vmem [#allocation7], %s515
        // Predicated region
        $region65: #{tpu_custom_call.1} parent=55 // pred_check
          %p517 = pneg %p129
        $region66: #{tpu_custom_call.1} parent=55 // pred_check_branch
          %519 = sbr.rel (%p517) target = $region68
        $region67: #{tpu_custom_call.1} parent=55 // pred_region
          %520 = dma.done %s513, 128
        $region68: #{tpu_custom_call.1} parent=55 // pred_fallthru
          _
        // Predicated region
        $region69: #{tpu_custom_call.1} parent=55 // pred_check
          %p521 = pneg %p150
        $region70: #{tpu_custom_call.1} parent=55 // pred_check_branch
          %523 = sbr.rel (%p521) target = $region72
        $region71: #{tpu_custom_call.1} parent=55 // pred_region
          %524 = dma.done [#allocation9], 256
        $region72: #{tpu_custom_call.1} parent=55 // pred_fallthru
          _
        // Predicated region
        $region73: #{tpu_custom_call.1} parent=55 // pred_check
          %p525 = pneg %p171
        $region74: #{tpu_custom_call.1} parent=55 // pred_check_branch
          %527 = sbr.rel (%p525) target = $region76
        $region75: #{tpu_custom_call.1} parent=55 // pred_region
          %528 = dma.done [#allocation9], 256
        $region76: #{tpu_custom_call.1} parent=55 // pred_fallthru
          _
        // Predicated region
        $region77: #{tpu_custom_call.1} parent=55 // pred_check
          %p529 = pneg %p192
        $region78: #{tpu_custom_call.1} parent=55 // pred_check_branch
          %531 = sbr.rel (%p529) target = $region80
        $region79: #{tpu_custom_call.1} parent=55 // pred_region
          %532 = dma.done [#allocation12], 256
        $region80: #{tpu_custom_call.1} parent=55 // pred_fallthru
          _
        // Predicated region
        $region81: #{tpu_custom_call.1} parent=55 // pred_check
          %p533 = pneg %p213
        $region82: #{tpu_custom_call.1} parent=55 // pred_check_branch
          %535 = sbr.rel (%p533) target = $region84
        $region83: #{tpu_custom_call.1} parent=55 // pred_region
          %536 = dma.done [#allocation12], 16
        $region84: #{tpu_custom_call.1} parent=55 // pred_fallthru
          _
        // Predicated region
        $region85: #{tpu_custom_call.1} parent=55 // pred_check
          %p537 = pneg %p234
        $region86: #{tpu_custom_call.1} parent=55 // pred_check_branch
          %539 = sbr.rel (%p537) target = $region88
        $region87: #{tpu_custom_call.1} parent=55 // pred_region
          %540 = dma.done [#allocation15], 16
        $region88: #{tpu_custom_call.1} parent=55 // pred_fallthru
          _
        // Predicated region
        $region89: #{tpu_custom_call.1} parent=55 // pred_check
          %p541 = pneg %p255
        $region90: #{tpu_custom_call.1} parent=55 // pred_check_branch
          %543 = sbr.rel (%p541) target = $region92
        $region91: #{tpu_custom_call.1} parent=55 // pred_region
          %544 = dma.done [#allocation15], 16
        $region92: #{tpu_custom_call.1} parent=55 // pred_fallthru
          _
        %s545 = sand.u32 %s60, 1
        %s546 = scalar_lea.sflag [#allocation3], %s545
        %s547 = sand.u32 %s60, 1
        %s548 = smul.addr %s547, 8
        %s549 = scalar_lea.vmem [#allocation2], %s548
        %p550 = pneg %p73
        %p551 = pneg %p70
        %s552 = sand.u32 %s38, 1
        %s553 = scalar_lea.sflag [#allocation6], %s552
        %s554 = sand.u32 %s88, 1
        %s555 = smul.addr %s554, 8
        %s556 = scalar_lea.vmem [#allocation5], %s555
        %p557 = pneg %p101
        %p558 = pneg %p98
        %s559 = sand.u32 %s38, 1
        %s560 = scalar_lea.sflag [#allocation6], %s559
        %s561 = sand.u32 %s116, 1
        %s562 = smul.addr %s561, 8
        %s563 = scalar_lea.vmem [#allocation7], %s562
        %p564 = pneg %p129
        %p565 = pneg %p126
        %p566 = pneg %p150
        %p567 = pneg %p147
        %p568 = pneg %p171
        %p569 = pneg %p168
        %p570 = pneg %p192
        %p571 = pneg %p189
        %p572 = pneg %p213
        %p573 = pneg %p210
        %p574 = pneg %p234
        %p575 = pneg %p231
        %p576 = pneg %p255
        %p577 = pneg %p252
        %p578 = pneg %p283
        %p579 = pneg %p280
        %s580 = sand.u32 %s270, 1
        %s581 = scalar_lea.sflag [#allocation4], %s580
        %s582 = sand.u32 %s270, 1
        %s583 = smul.addr %s582, 16
        %s584 = scalar_lea.vmem [#allocation17], %s583
        %p585 = pneg %p311
        %p586 = pneg %p308
        %s587 = sand.u32 %s38, 1
        %s588 = scalar_lea.sflag [#allocation19], %s587
        %s589 = sand.u32 %s298, 1
        %s590 = smul.addr %s589, 16
        %s591 = scalar_lea.vmem [#allocation18], %s590
        %p592 = pneg %p339
        %p593 = pneg %p336
        %s594 = sand.u32 %s38, 1
        %s595 = scalar_lea.sflag [#allocation19], %s594
        %s596 = sand.u32 %s326, 1
        %s597 = smul.addr %s596, 16
        %s598 = scalar_lea.vmem [#allocation20], %s597
        %v600 = vld [vmem:[%s498] sm:$0xff]
        %v601 = vpack.c.bf16 %v600, %v600
        %v602 = vld [vmem:[#allocation8] sm:$0xf]
        %v603 = vld [vmem:[#allocation8 + $0x4] sm:$0xf]
        %v604 = vld [vmem:[#allocation8 + $0x8] sm:$0xf]
        %v605 = vld [vmem:[#allocation8 + $0xc] sm:$0xf]
        %v606 = vld [vmem:[#allocation13] sm:$0x1]
        %v608 = vlaneseq
        %v609 = vshrl.u32 %v608, 7
        %v610 = vsub.s32 0, %v609
        %v611 = vrot.slane %v606, %v610
        %v617 = vunpack.c.l.b16 %v602
        %v618 = vunpack.c.l.b16 %v603
        %v619 = vunpack.c.l.b16 %v604
        %v620 = vunpack.c.l.b16 %v605
        %v621 = vpack.c.b16 %v618, %v617
        %v622 = vpack.c.b16 %v620, %v619
        %vm625 = vcmask 261120
        %v627 = vsel %vm625, %v601, 0
        %629 = vmatprep.subr.bf16.mxu0 0
        %630 = vmatpush1.bf16.msra.mxu0 %v621
        %631 = vmatprep.subr.bf16.mxu0 0
        %632 = vmatpush1.bf16.msra.mxu0 %v622
        %633 = vmatprep.subr.bf16.mxu0 0
        %634 = vmatpush1.bf16.msra.mxu0 0
        %635 = vmatprep.subr.bf16.mxu0 0
        %636 = vmatpush1.bf16.msra.mxu0 0
        %637 = vmatprep.subr.bf16.mxu0 0
        %638 = vmatpush1.bf16.msra.mxu0 0
        %639 = vmatprep.subr.bf16.mxu0 0
        %640 = vmatpush1.bf16.msra.mxu0 0
        %641 = vmatprep.subr.bf16.mxu0 0
        %642 = vmatpush1.bf16.msra.mxu0 0
        %643 = vmatprep.subr.bf16.mxu0 0
        %644 = vmatpush1.bf16.msra.mxu0 0
        %645 = vmatprep.subr.bf16.mxu0 0
        %646 = vmatpush1.bf16.msra.mxu0 0
        %647 = vmatprep.subr.bf16.mxu0 0
        %648 = vmatpush1.bf16.msra.mxu0 0
        %649 = vmatprep.subr.bf16.mxu0 0
        %650 = vmatpush1.bf16.msra.mxu0 0
        %651 = vmatprep.subr.bf16.mxu0 0
        %652 = vmatpush1.bf16.msra.mxu0 0
        %653 = vmatprep.subr.bf16.mxu0 0
        %654 = vmatpush1.bf16.msra.mxu0 0
        %655 = vmatprep.subr.bf16.mxu0 0
        %656 = vmatpush1.bf16.msra.mxu0 0
        %657 = vmatprep.subr.bf16.mxu0 0
        %658 = vmatpush1.bf16.msra.mxu0 0
        %659 = vmatprep.subr.bf16.mxu0 0
        %660 = vmatpush1.bf16.msra.mxu0 0
        %661 = vmatprep.mubr.bf16.mxu0 0
        %662 = vmatmul.mubr.bf16.gmra.mrb[0].mxu0 %v627
        %v663 = vpop.f32.mrb[0].mxu0
        %v664 = vadd.f32 %v611, %v663
        %v665 = vpop.f32.mrb[0].mxu0
        %v666 = vpop.f32.mrb[0].mxu0
        %v667 = vpop.f32.mrb[0].mxu0
        %668 = vdwg.mxu0
        %v669 = vpack.c.bf16 %v664, %v664
        %vm670 = vcmask 60416
        %671 = vst.msk [vmem:[%s584] sm:$0xf] %vm670, %v669
        %v673 = vunpack.c.l.b16 %v669
        %v674 = vpack.c.b16 %v673, %v673
        %675 = vrot.lane.b32.xlu0 %v674, 120
        %v676 = vpop.permute.xlu0 %675
        %s678 = scalar_lea.vmem %s584, 4 [#allocation17]
        %679 = vst.msk [vmem:[%s678] sm:$0xf] %vm670, %v676
        %680 = vrot.lane.b32.xlu0 %v674, 112
        %v681 = vpop.permute.xlu0 %680
        %s683 = scalar_lea.vmem %s584, 8 [#allocation17]
        %684 = vst.msk [vmem:[%s683] sm:$0xf] %vm670, %v681
        %685 = vrot.lane.b32.xlu0 %v674, 104
        %v686 = vpop.permute.xlu0 %685
        %s688 = scalar_lea.vmem %s584, 12 [#allocation17]
        %689 = vst.msk [vmem:[%s688] sm:$0xf] %vm670, %v686
        %v690 = vld [vmem:[%s507] sm:$0xff]
        %v691 = vpack.c.bf16 %v690, %v690
        %v692 = vld [vmem:[#allocation10] sm:$0xf]
        %v693 = vld [vmem:[#allocation10 + $0x4] sm:$0xf]
        %v694 = vld [vmem:[#allocation10 + $0x8] sm:$0xf]
        %v695 = vld [vmem:[#allocation10 + $0xc] sm:$0xf]
        %v696 = vld [vmem:[#allocation14] sm:$0x1]
        %v698 = vlaneseq
        %v699 = vshrl.u32 %v698, 7
        %v700 = vsub.s32 0, %v699
        %v701 = vrot.slane %v696, %v700
        %v707 = vunpack.c.l.b16 %v692
        %v708 = vunpack.c.l.b16 %v693
        %v709 = vunpack.c.l.b16 %v694
        %v710 = vunpack.c.l.b16 %v695
        %v711 = vpack.c.b16 %v708, %v707
        %v712 = vpack.c.b16 %v710, %v709
        %v716 = vsel %vm625, %v691, 0
        %718 = vmatprep.subr.bf16.mxu0 0
        %719 = vmatpush1.bf16.msra.mxu0 %v711
        %720 = vmatprep.subr.bf16.mxu0 0
        %721 = vmatpush1.bf16.msra.mxu0 %v712
        %722 = vmatprep.subr.bf16.mxu0 0
        %723 = vmatpush1.bf16.msra.mxu0 0
        %724 = vmatprep.subr.bf16.mxu0 0
        %725 = vmatpush1.bf16.msra.mxu0 0
        %726 = vmatprep.subr.bf16.mxu0 0
        %727 = vmatpush1.bf16.msra.mxu0 0
        %728 = vmatprep.subr.bf16.mxu0 0
        %729 = vmatpush1.bf16.msra.mxu0 0
        %730 = vmatprep.subr.bf16.mxu0 0
        %731 = vmatpush1.bf16.msra.mxu0 0
        %732 = vmatprep.subr.bf16.mxu0 0
        %733 = vmatpush1.bf16.msra.mxu0 0
        %734 = vmatprep.subr.bf16.mxu0 0
        %735 = vmatpush1.bf16.msra.mxu0 0
        %736 = vmatprep.subr.bf16.mxu0 0
        %737 = vmatpush1.bf16.msra.mxu0 0
        %738 = vmatprep.subr.bf16.mxu0 0
        %739 = vmatpush1.bf16.msra.mxu0 0
        %740 = vmatprep.subr.bf16.mxu0 0
        %741 = vmatpush1.bf16.msra.mxu0 0
        %742 = vmatprep.subr.bf16.mxu0 0
        %743 = vmatpush1.bf16.msra.mxu0 0
        %744 = vmatprep.subr.bf16.mxu0 0
        %745 = vmatpush1.bf16.msra.mxu0 0
        %746 = vmatprep.subr.bf16.mxu0 0
        %747 = vmatpush1.bf16.msra.mxu0 0
        %748 = vmatprep.subr.bf16.mxu0 0
        %749 = vmatpush1.bf16.msra.mxu0 0
        %750 = vmatprep.mubr.bf16.mxu0 0
        %751 = vmatmul.mubr.bf16.gmra.mrb[0].mxu0 %v716
        %v752 = vpop.f32.mrb[0].mxu0
        %v753 = vadd.f32 %v701, %v752
        %v754 = vpop.f32.mrb[0].mxu0
        %v755 = vpop.f32.mrb[0].mxu0
        %v756 = vpop.f32.mrb[0].mxu0
        %757 = vdwg.mxu0
        %v758 = vpack.c.bf16 %v753, %v753
        %759 = vst.msk [vmem:[%s591] sm:$0xf] %vm670, %v758
        %v761 = vunpack.c.l.b16 %v758
        %v762 = vpack.c.b16 %v761, %v761
        %763 = vrot.lane.b32.xlu0 %v762, 120
        %v764 = vpop.permute.xlu0 %763
        %s766 = scalar_lea.vmem %s591, 4 [#allocation18]
        %767 = vst.msk [vmem:[%s766] sm:$0xf] %vm670, %v764
        %768 = vrot.lane.b32.xlu0 %v762, 112
        %v769 = vpop.permute.xlu0 %768
        %s771 = scalar_lea.vmem %s591, 8 [#allocation18]
        %772 = vst.msk [vmem:[%s771] sm:$0xf] %vm670, %v769
        %773 = vrot.lane.b32.xlu0 %v762, 104
        %v774 = vpop.permute.xlu0 %773
        %s776 = scalar_lea.vmem %s591, 12 [#allocation18]
        %777 = vst.msk [vmem:[%s776] sm:$0xf] %vm670, %v774
        %v778 = vld [vmem:[%s516] sm:$0xff]
        %v779 = vpack.c.bf16 %v778, %v778
        %v780 = vld [vmem:[#allocation11] sm:$0xf]
        %v781 = vld [vmem:[#allocation11 + $0x4] sm:$0xf]
        %v782 = vld [vmem:[#allocation11 + $0x8] sm:$0xf]
        %v783 = vld [vmem:[#allocation11 + $0xc] sm:$0xf]
        %v784 = vld [vmem:[#allocation16] sm:$0x1]
        %v786 = vlaneseq
        %v787 = vshrl.u32 %v786, 7
        %v788 = vsub.s32 0, %v787
        %v789 = vrot.slane %v784, %v788
        %v795 = vunpack.c.l.b16 %v780
        %v796 = vunpack.c.l.b16 %v781
        %v797 = vunpack.c.l.b16 %v782
        %v798 = vunpack.c.l.b16 %v783
        %v799 = vpack.c.b16 %v796, %v795
        %v800 = vpack.c.b16 %v798, %v797
        %v804 = vsel %vm625, %v779, 0
        %806 = vmatprep.subr.bf16.mxu0 0
        %807 = vmatpush1.bf16.msra.mxu0 %v799
        %808 = vmatprep.subr.bf16.mxu0 0
        %809 = vmatpush1.bf16.msra.mxu0 %v800
        %810 = vmatprep.subr.bf16.mxu0 0
        %811 = vmatpush1.bf16.msra.mxu0 0
        %812 = vmatprep.subr.bf16.mxu0 0
        %813 = vmatpush1.bf16.msra.mxu0 0
        %814 = vmatprep.subr.bf16.mxu0 0
        %815 = vmatpush1.bf16.msra.mxu0 0
        %816 = vmatprep.subr.bf16.mxu0 0
        %817 = vmatpush1.bf16.msra.mxu0 0
        %818 = vmatprep.subr.bf16.mxu0 0
        %819 = vmatpush1.bf16.msra.mxu0 0
        %820 = vmatprep.subr.bf16.mxu0 0
        %821 = vmatpush1.bf16.msra.mxu0 0
        %822 = vmatprep.subr.bf16.mxu0 0
        %823 = vmatpush1.bf16.msra.mxu0 0
        %824 = vmatprep.subr.bf16.mxu0 0
        %825 = vmatpush1.bf16.msra.mxu0 0
        %826 = vmatprep.subr.bf16.mxu0 0
        %827 = vmatpush1.bf16.msra.mxu0 0
        %828 = vmatprep.subr.bf16.mxu0 0
        %829 = vmatpush1.bf16.msra.mxu0 0
        %830 = vmatprep.subr.bf16.mxu0 0
        %831 = vmatpush1.bf16.msra.mxu0 0
        %832 = vmatprep.subr.bf16.mxu0 0
        %833 = vmatpush1.bf16.msra.mxu0 0
        %834 = vmatprep.subr.bf16.mxu0 0
        %835 = vmatpush1.bf16.msra.mxu0 0
        %836 = vmatprep.subr.bf16.mxu0 0
        %837 = vmatpush1.bf16.msra.mxu0 0
        %838 = vmatprep.mubr.bf16.mxu0 0
        %839 = vmatmul.mubr.bf16.gmra.mrb[0].mxu0 %v804
        %v840 = vpop.f32.mrb[0].mxu0
        %v841 = vadd.f32 %v789, %v840
        %v842 = vpop.f32.mrb[0].mxu0
        %v843 = vpop.f32.mrb[0].mxu0
        %v844 = vpop.f32.mrb[0].mxu0
        %845 = vdwg.mxu0
        %v846 = vpack.c.bf16 %v841, %v841
        %847 = vst.msk [vmem:[%s598] sm:$0xf] %vm670, %v846
        %v849 = vunpack.c.l.b16 %v846
        %v850 = vpack.c.b16 %v849, %v849
        %851 = vrot.lane.b32.xlu0 %v850, 120
        %v852 = vpop.permute.xlu0 %851
        %s854 = scalar_lea.vmem %s598, 4 [#allocation20]
        %855 = vst.msk [vmem:[%s854] sm:$0xf] %vm670, %v852
        %856 = vrot.lane.b32.xlu0 %v850, 112
        %v857 = vpop.permute.xlu0 %856
        %s859 = scalar_lea.vmem %s598, 8 [#allocation20]
        %860 = vst.msk [vmem:[%s859] sm:$0xf] %vm670, %v857
        %861 = vrot.lane.b32.xlu0 %v850, 104
        %v862 = vpop.permute.xlu0 %861
        %s864 = scalar_lea.vmem %s598, 12 [#allocation20]
        %865 = vst.msk [vmem:[%s864] sm:$0xf] %vm670, %v862
        %s866 = sand.u32 %s270, 1
        %s867 = scalar_lea.sflag [#allocation4], %s866
        %s868 = sand.u32 %s270, 1
        %s869 = smul.addr %s868, 16
        %s870 = scalar_lea.vmem [#allocation17], %s869
        %s871 = sand.u32 %s38, 1
        %s872 = scalar_lea.sflag [#allocation19], %s871
        %s873 = sand.u32 %s298, 1
        %s874 = smul.addr %s873, 16
        %s875 = scalar_lea.vmem [#allocation18], %s874
        %s876 = sand.u32 %s38, 1
        %s877 = scalar_lea.sflag [#allocation19], %s876
        %s878 = sand.u32 %s326, 1
        %s879 = smul.addr %s878, 16
        %s880 = scalar_lea.vmem [#allocation20], %s879
        // Predicated region
        $region93: #{tpu_custom_call.1} parent=55 // pred_check
          %p881 = pneg %p280
        $region94: #{tpu_custom_call.1} parent=55 // pred_check_branch
          %883 = sbr.rel (%p881) target = $region96
        $region95: #{tpu_custom_call.1} parent=55 // pred_region
          %s885 = ssub.s32 256, 256
          %886 = vsyncadd %s867, %s885
          %s887 = smul.addr %s42, 4
          %s888 = sadd.s32 %s43, %s887
          %s889 = smul.addr %s888, 64
          %s890 = scalar_lea.hbm %s9, %s889
          %s891 = sshll.u32 %s870, 4
          %s892 = int_to_ptr.vmem [resolvable:$true] %s891
          %897 = dma.vmem_to_hbm [thread:$0]  %s892, 256, %s890, %s867, 64, 64, 4
        $region96: #{tpu_custom_call.1} parent=55 // pred_fallthru
          _
        // Predicated region
        $region97: #{tpu_custom_call.1} parent=55 // pred_check
          %p898 = pneg %p308
        $region98: #{tpu_custom_call.1} parent=55 // pred_check_branch
          %900 = sbr.rel (%p898) target = $region100
        $region99: #{tpu_custom_call.1} parent=55 // pred_region
          %s902 = ssub.s32 256, 256
          %903 = vsyncadd %s872, %s902
          %s904 = smul.addr %s42, 4
          %s905 = sadd.s32 %s43, %s904
          %s906 = smul.addr %s905, 64
          %s907 = scalar_lea.hbm %s10, %s906
          %s908 = sshll.u32 %s875, 4
          %s909 = int_to_ptr.vmem [resolvable:$true] %s908
          %914 = dma.vmem_to_hbm [thread:$0]  %s909, 256, %s907, %s872, 64, 64, 4
        $region100: #{tpu_custom_call.1} parent=55 // pred_fallthru
          _
        // Predicated region
        $region101: #{tpu_custom_call.1} parent=55 // pred_check
          %p915 = pneg %p336
        $region102: #{tpu_custom_call.1} parent=55 // pred_check_branch
          %917 = sbr.rel (%p915) target = $region104
        $region103: #{tpu_custom_call.1} parent=55 // pred_region
          %s919 = ssub.s32 256, 256
          %920 = vsyncadd %s877, %s919
          %s921 = smul.addr %s42, 4
          %s922 = sadd.s32 %s43, %s921
          %s923 = smul.addr %s922, 64
          %s924 = scalar_lea.hbm %s11, %s923
          %s925 = sshll.u32 %s880, 4
          %s926 = int_to_ptr.vmem [resolvable:$true] %s925
          %931 = dma.vmem_to_hbm [thread:$0]  %s926, 256, %s924, %s877, 64, 64, 4
        $region104: #{tpu_custom_call.1} parent=55 // pred_fallthru
          _
      $region56: #{tpu_custom_call.1} parent=5 // pred_fallthru
        _
      %p932 = scmp.le.s32.totalorder 2, %s33
      // Predicated region
      $region105: #{tpu_custom_call.1} parent=5 // pred_check
        %p933 = pneg %p932
      $region106: #{tpu_custom_call.1} parent=5 // pred_check_branch
        %935 = sbr.rel (%p933) target = $region108
      $region107: #{tpu_custom_call.1} parent=5 // pred_region
        %s936 = ssub.s32 %s33, 2
        // Predicated region
        $region109: #{tpu_custom_call.1} parent=107 // pred_check
          %p937 = pneg %p286
        $region110: #{tpu_custom_call.1} parent=107 // pred_check_branch
          %939 = sbr.rel (%p937) target = $region112
        $region111: #{tpu_custom_call.1} parent=107 // pred_region
          %s940 = sand.u32 %s271, 1
          %s941 = scalar_lea.sflag [#allocation4], %s940
          %s942 = sand.u32 %s271, 1
          %s943 = smul.addr %s942, 16
          %s944 = scalar_lea.vmem [#allocation17], %s943
          %945 = dma.done %s941, 256
        $region112: #{tpu_custom_call.1} parent=107 // pred_fallthru
          _
        // Predicated region
        $region113: #{tpu_custom_call.1} parent=107 // pred_check
          %p946 = pneg %p314
        $region114: #{tpu_custom_call.1} parent=107 // pred_check_branch
          %948 = sbr.rel (%p946) target = $region116
        $region115: #{tpu_custom_call.1} parent=107 // pred_region
          %s949 = sand.u32 %s39, 1
          %s950 = scalar_lea.sflag [#allocation19], %s949
          %s951 = sand.u32 %s299, 1
          %s952 = smul.addr %s951, 16
          %s953 = scalar_lea.vmem [#allocation18], %s952
          %954 = dma.done %s950, 256
        $region116: #{tpu_custom_call.1} parent=107 // pred_fallthru
          _
        // Predicated region
        $region117: #{tpu_custom_call.1} parent=107 // pred_check
          %p955 = pneg %p342
        $region118: #{tpu_custom_call.1} parent=107 // pred_check_branch
          %957 = sbr.rel (%p955) target = $region120
        $region119: #{tpu_custom_call.1} parent=107 // pred_region
          %s958 = sand.u32 %s39, 1
          %s959 = scalar_lea.sflag [#allocation19], %s958
          %s960 = sand.u32 %s327, 1
          %s961 = smul.addr %s960, 16
          %s962 = scalar_lea.vmem [#allocation20], %s961
          %963 = dma.done %s959, 256
        $region120: #{tpu_custom_call.1} parent=107 // pred_fallthru
          _
      $region108: #{tpu_custom_call.1} parent=5 // pred_fallthru
        _
    $region6: #{tpu_custom_call.1} parent=1 // loop_footer
      %s37 = sadd.s32 1, %s33
    $region7: #{tpu_custom_call.1} parent=1 // loop_footer_branch
      %32 = sbr.rel target = $region3
    $region8: #{tpu_custom_call.1} parent=1 // loop_exit
      _
    %964 = vsyncpa [#allocation3], 1
    %s965 = scalar_lea.sflag [#allocation3], 1
    %966 = vsyncpa %s965, 1
    %967 = vsyncpa [#allocation6], 1
    %s968 = scalar_lea.sflag [#allocation6], 1
    %969 = vsyncpa %s968, 1
    %970 = vsyncpa [#allocation9], 1
    %971 = vsyncpa [#allocation12], 1
    %972 = vsyncpa [#allocation15], 1
    %973 = vsyncpa [#allocation4], 1
    %s974 = scalar_lea.sflag [#allocation4], 1
    %975 = vsyncpa %s974, 1
    %976 = vsyncpa [#allocation19], 1
    %s977 = scalar_lea.sflag [#allocation19], 1
    %978 = vsyncpa %s977, 1

</llo_original>
